<compile_context>
chip_gen: v7x
topology: tpu7x:2x2x1
jax: 0.10.0
libtpu: 0.0.40
codegen_flags: <defaults>
</compile_context>

<pallas_src>
import functools

import jax
import jax.numpy as jnp
from jax.experimental import pallas as pl
from jax.experimental.pallas import tpu as pltpu


def _attn_pool_kernel(x_ref, w_ref, o_ref, m_sc, l_sc, acc_sc, *,
                      n_total, block_n):
    # x_ref:  VMEM (block_n, D)   current tile of items
    # w_ref:  VMEM (1, D)         lane-dense Linear weight
    # o_ref:  VMEM (1, D)         pooled output for the current group
    # m_sc/l_sc: VMEM (1, 1)      running softmax max / denom
    # acc_sc: VMEM (1, D)         running sum of x * exp(score - m)
    ni = pl.program_id(1)

    @pl.when(ni == 0)
    def _init():
        m_sc[...] = jnp.full_like(m_sc, -jnp.inf)
        l_sc[...] = jnp.zeros_like(l_sc)
        acc_sc[...] = jnp.zeros_like(acc_sc)

    x = x_ref[...].astype(jnp.float32)          # (block_n, D)
    w = w_ref[...].astype(jnp.float32)          # (1, D)

    # Mask rows past the true N (last, partial tile). Zero the rows so padded
    # garbage can never reach the accumulators.
    row = jax.lax.broadcasted_iota(jnp.int32, (block_n, 1), 0) + ni * block_n
    valid = row < n_total                       # (block_n, 1)
    x = jnp.where(valid, x, 0.0)

    # Linear(D, 1) without bias: VPU broadcast-mul + cross-lane reduce.
    # (bias omitted: softmax over dim=0 is shift-invariant.)
    scores = jnp.sum(x * w, axis=-1, keepdims=True)          # (block_n, 1)
    scores = jnp.where(valid, scores, -jnp.inf)

    # Online softmax update (reduction over the N grid axis).
    m_prev = m_sc[...]                                        # (1, 1)
    m_new = jnp.maximum(m_prev, jnp.max(scores, axis=0, keepdims=True))
    alpha = jnp.exp(m_prev - m_new)                           # (1, 1)
    e = jnp.exp(scores - m_new)                               # (block_n, 1)

    l_sc[...] = alpha * l_sc[...] + jnp.sum(e, axis=0, keepdims=True)
    acc_sc[...] = alpha * acc_sc[...] + jnp.sum(x * e, axis=0, keepdims=True)
    m_sc[...] = m_new

    @pl.when(ni == pl.num_programs(1) - 1)
    def _finalize():
        # Deferred normalization: one reciprocal per group, scales D elements.
        inv_l = pl.reciprocal(l_sc[...], approx=True)
        o_ref[...] = (acc_sc[...] * inv_l).astype(o_ref.dtype)


def _choose_block_n(n, max_block=512):
    """Largest legal N tile: full N when small, else a multiple-of-8 cap."""
    if n <= max_block:
        return n
    return max_block


def _pooled_call(x_gnd, weight_row, *, block_n):
    """x_gnd: (G, N, D) f32/bf16; weight_row: (1, D). Returns (G, D) f32."""
    G, N, D = x_gnd.shape
    nb = pl.cdiv(N, block_n)
    kernel = functools.partial(_attn_pool_kernel, n_total=N, block_n=block_n)

    out = pl.pallas_call(
        kernel,
        out_shape=jax.ShapeDtypeStruct((G, 1, D), jnp.float32),
        grid_spec=pltpu.PrefetchScalarGridSpec(
            num_scalar_prefetch=0,
            grid=(G, nb),                                     # groups x N-tiles
            in_specs=[
                # x tile: leading group dim squeezed out of the kernel ref.
                pl.BlockSpec((None, block_n, D), lambda g, ni: (g, ni, 0)),
                # lane-dense weight, resident across the whole grid.
                pl.BlockSpec((1, D), lambda g, ni: (0, 0)),
            ],
            # per-group output block, resident across the N (reduction) axis.
            out_specs=pl.BlockSpec((None, 1, D), lambda g, ni: (g, 0, 0)),
            scratch_shapes=[
                pltpu.VMEM((1, 1), jnp.float32),   # running max  m
                pltpu.VMEM((1, 1), jnp.float32),   # running sum  l
                pltpu.VMEM((1, D), jnp.float32),   # running acc  sum(x * e)
            ],
        ),
        compiler_params=pltpu.CompilerParams(
            dimension_semantics=("parallel", "arbitrary"),
        ),
        cost_estimate=pl.CostEstimate(
            flops=5 * G * N * D,
            transcendentals=G * N,
            bytes_accessed=G * N * D * 4 + D * 4 + G * D * 4,
        ),
    )(x_gnd, weight_row)
    return out.reshape(G, D)


def global_attn_pool(x, weight, bias=None, *, block_n=None):
    """GlobalAttnPool forward. x: (N, D); weight: (1, D) torch Linear layout.

    `bias` is accepted for interface parity but unused: softmax over dim=0 is
    shift-invariant, so a scalar bias added to every score cancels exactly.
    """
    del bias
    N, D = x.shape
    if block_n is None:
        block_n = _choose_block_n(N)
    out = _pooled_call(x[None], weight.reshape(1, D), block_n=block_n)
    return out.reshape(D)


def global_attn_pool_batched(x, weight, bias=None, *, block_n=None):
    """Batched variant: x (G, N, D) -> (G, D), all groups in one pallas_call."""
    del bias
    G, N, D = x.shape
    if block_n is None:
        block_n = _choose_block_n(N)
    return _pooled_call(x, weight.reshape(1, D), block_n=block_n)


def _reference(x, weight, bias):
    scores = x @ weight.T + bias                      # (N, 1)
    logits = jax.nn.softmax(scores, axis=0)           # softmax over dim=0
    return (x * logits).sum(axis=0)                   # (D,)


if __name__ == "__main__":
    key = jax.random.PRNGKey(0)
    k1, k2, k3, k4 = jax.random.split(key, 4)

    # Shapes implied by the module: N items, D = CNT_CATS * TOP_K_PROP_NAMES.
    N, D = 8, 32
    x = jax.random.normal(k1, (N, D), dtype=jnp.float32)

    # Deterministic Linear(D, 1) params (torch layout: weight (1, D), bias (1,)).
    bound = 1.0 / jnp.sqrt(jnp.float32(D))
    weight = jax.random.uniform(k2, (1, D), jnp.float32, -bound, bound)
    bias = jax.random.uniform(k3, (1,), jnp.float32, -bound, bound)

    # --- single-group (matches the PyTorch module forward) ---
    out = global_attn_pool(x, weight, bias)
    jax.block_until_ready(out)
    ref = _reference(x, weight, bias)
    assert out.shape == (D,)
    # tolerance loosened slightly for the EUP approximate reciprocal.
    assert jnp.allclose(out, ref, atol=2e-3, rtol=2e-3), (out, ref)

    # --- batched + tiled path: multiple groups, N not a multiple of the tile,
    #     exercises the online softmax, row masking and grid pipelining ---
    G, N2 = 3, 1000
    xb = jax.random.normal(k4, (G, N2, D), dtype=jnp.float32)
    outb = global_attn_pool_batched(xb, weight, bias, block_n=256)
    jax.block_until_ready(outb)
    assert outb.shape == (G, D)
    for g in range(G):
        refg = _reference(xb[g], weight, bias)
        assert jnp.allclose(outb[g], refg, atol=2e-3, rtol=2e-3), (g, outb[g], refg)

    print("KERNEL_OK")
</pallas_src>

<mosaic_0001>
module attributes {stable_mosaic.version = 11 : i64} {
  func.func @_attn_pool_kernel(%arg0: i32, %arg1: i32, %arg2: memref<1x8x32xf32, #tpu.memory_space<vmem>>, %arg3: memref<1x32xf32, #tpu.memory_space<vmem>>, %arg4: memref<1x1x32xf32, #tpu.memory_space<vmem>>, %arg5: memref<1x1xf32, #tpu.memory_space<vmem>>, %arg6: memref<1x1xf32, #tpu.memory_space<vmem>>, %arg7: memref<1x32xf32, #tpu.memory_space<vmem>>) attributes {dimension_semantics = [#tpu.dimension_semantics<parallel>, #tpu.dimension_semantics<arbitrary>], iteration_bounds = array<i64: 1, 1>, scalar_prefetch = 0 : i64, scratch_operands = 3 : i64, tpu.core_type = #tpu.core_type<tc>, window_params = [{transform_indices = @transform_0, window_bounds = array<i64: 1, 8, 32>}, {pipeline_mode = #tpu.pipeline_mode<synchronous>, transform_indices = @transform_1, window_bounds = array<i64: 1, 32>}, {transform_indices = @transform_2, window_bounds = array<i64: 1, 1, 32>}]} {
    %c0_i32 = arith.constant 0 : i32
    %0 = arith.cmpi eq, %arg1, %c0_i32 : i32
    %1 = arith.extui %0 : i1 to i32
    %c0_i32_0 = arith.constant 0 : i32
    %2 = arith.cmpi ne, %1, %c0_i32_0 : i32
    scf.if %2 {
      %cst_25 = arith.constant 0xFF800000 : f32
      %50 = vector.broadcast %cst_25 : f32 to vector<1x1xf32>
      %c0_26 = arith.constant 0 : index
      %c0_27 = arith.constant 0 : index
      %51 = vector.load %arg5[%c0_26, %c0_27] : memref<1x1xf32, #tpu.memory_space<vmem>>, vector<1x1xf32>
      tpu.vector_store %arg5[%c0_26, %c0_27], %50 {strides = array<i32>} : memref<1x1xf32, #tpu.memory_space<vmem>>, vector<1x1xf32>,
      %cst_28 = arith.constant 0.000000e+00 : f32
      %52 = vector.broadcast %cst_28 : f32 to vector<1x1xf32>
      %c0_29 = arith.constant 0 : index
      %c0_30 = arith.constant 0 : index
      %53 = vector.load %arg6[%c0_29, %c0_30] : memref<1x1xf32, #tpu.memory_space<vmem>>, vector<1x1xf32>
      tpu.vector_store %arg6[%c0_29, %c0_30], %52 {strides = array<i32>} : memref<1x1xf32, #tpu.memory_space<vmem>>, vector<1x1xf32>,
      %cst_31 = arith.constant 0.000000e+00 : f32
      %54 = vector.broadcast %cst_31 : f32 to vector<1x32xf32>
      %c0_32 = arith.constant 0 : index
      %c0_33 = arith.constant 0 : index
      %55 = vector.load %arg7[%c0_32, %c0_33] : memref<1x32xf32, #tpu.memory_space<vmem>>, vector<1x32xf32>
      tpu.vector_store %arg7[%c0_32, %c0_33], %54 {strides = array<i32>} : memref<1x32xf32, #tpu.memory_space<vmem>>, vector<1x32xf32>,
    } else {
    }
    %c0 = arith.constant 0 : index
    %c0_1 = arith.constant 0 : index
    %c0_2 = arith.constant 0 : index
    %3 = vector.load %arg2[%c0, %c0_1, %c0_2] : memref<1x8x32xf32, #tpu.memory_space<vmem>>, vector<1x8x32xf32>
    %4 = vector.shape_cast %3 : vector<1x8x32xf32> to vector<8x32xf32>
    %c0_3 = arith.constant 0 : index
    %c0_4 = arith.constant 0 : index
    %5 = vector.load %arg3[%c0_3, %c0_4] : memref<1x32xf32, #tpu.memory_space<vmem>>, vector<1x32xf32>
    %6 = tpu.iota {dimensions = array<i32: 0>} : vector<8x1xi32>
    %c8_i32 = arith.constant 8 : i32
    %7 = arith.muli %arg1, %c8_i32 : i32
    %8 = vector.broadcast %7 : i32 to vector<8x1xi32>
    %9 = arith.addi %6, %8 : vector<8x1xi32>
    %c8_i32_5 = arith.constant 8 : i32
    %10 = vector.broadcast %c8_i32_5 : i32 to vector<8x1xi32>
    %11 = arith.cmpi slt, %9, %10 : vector<8x1xi32>
    %cst = arith.constant 0.000000e+00 : f32
    %12 = vector.shape_cast %11 : vector<8x1xi1> to vector<8x1xi1>
    %13 = vector.broadcast %12 : vector<8x1xi1> to vector<8x32xi1>
    %14 = vector.broadcast %cst : f32 to vector<8x32xf32>
    %15 = arith.select %13, %4, %14 : vector<8x32xi1>, vector<8x32xf32>
    %16 = vector.broadcast %5 : vector<1x32xf32> to vector<8x32xf32>
    %17 = arith.mulf %15, %16 : vector<8x32xf32>
    %cst_6 = arith.constant dense<0.000000e+00> : vector<8xf32>
    %18 = vector.multi_reduction <add>, %17, %cst_6 [1] : vector<8x32xf32> to vector<8xf32>
    %19 = vector.shape_cast %18 : vector<8xf32> to vector<8x1xf32>
    %cst_7 = arith.constant 0xFF800000 : f32
    %20 = vector.broadcast %cst_7 : f32 to vector<8x1xf32>
    %21 = arith.select %11, %19, %20 : vector<8x1xi1>, vector<8x1xf32>
    %c0_8 = arith.constant 0 : index
    %c0_9 = arith.constant 0 : index
    %22 = vector.load %arg5[%c0_8, %c0_9] : memref<1x1xf32, #tpu.memory_space<vmem>>, vector<1x1xf32>
    %cst_10 = arith.constant dense<0xFF800000> : vector<1xf32>
    %23 = vector.multi_reduction <maximumf>, %21, %cst_10 [0] : vector<8x1xf32> to vector<1xf32>
    %24 = vector.shape_cast %23 : vector<1xf32> to vector<1x1xf32>
    %25 = arith.maximumf %22, %24 : vector<1x1xf32>
    %26 = arith.subf %22, %25 : vector<1x1xf32>
    %27 = math.exp %26 : vector<1x1xf32>
    %28 = vector.broadcast %25 : vector<1x1xf32> to vector<8x1xf32>
    %29 = arith.subf %21, %28 : vector<8x1xf32>
    %30 = math.exp %29 : vector<8x1xf32>
    %c0_11 = arith.constant 0 : index
    %c0_12 = arith.constant 0 : index
    %31 = vector.load %arg6[%c0_11, %c0_12] : memref<1x1xf32, #tpu.memory_space<vmem>>, vector<1x1xf32>
    %32 = arith.mulf %27, %31 : vector<1x1xf32>
    %cst_13 = arith.constant dense<0.000000e+00> : vector<1xf32>
    %33 = vector.multi_reduction <add>, %30, %cst_13 [0] : vector<8x1xf32> to vector<1xf32>
    %34 = vector.shape_cast %33 : vector<1xf32> to vector<1x1xf32>
    %35 = arith.addf %32, %34 : vector<1x1xf32>
    %c0_14 = arith.constant 0 : index
    %c0_15 = arith.constant 0 : index
    %36 = vector.load %arg6[%c0_14, %c0_15] : memref<1x1xf32, #tpu.memory_space<vmem>>, vector<1x1xf32>
    tpu.vector_store %arg6[%c0_14, %c0_15], %35 {strides = array<i32>} : memref<1x1xf32, #tpu.memory_space<vmem>>, vector<1x1xf32>,
    %c0_16 = arith.constant 0 : index
    %c0_17 = arith.constant 0 : index
    %37 = vector.load %arg7[%c0_16, %c0_17] : memref<1x32xf32, #tpu.memory_space<vmem>>, vector<1x32xf32>
    %38 = vector.broadcast %27 : vector<1x1xf32> to vector<1x32xf32>
    %39 = arith.mulf %38, %37 : vector<1x32xf32>
    %40 = vector.broadcast %30 : vector<8x1xf32> to vector<8x32xf32>
    %41 = arith.mulf %15, %40 : vector<8x32xf32>
    %cst_18 = arith.constant dense<0.000000e+00> : vector<32xf32>
    %42 = vector.multi_reduction <add>, %41, %cst_18 [0] : vector<8x32xf32> to vector<32xf32>
    %43 = vector.shape_cast %42 : vector<32xf32> to vector<1x32xf32>
    %44 = arith.addf %39, %43 : vector<1x32xf32>
    %c0_19 = arith.constant 0 : index
    %c0_20 = arith.constant 0 : index
    %45 = vector.load %arg7[%c0_19, %c0_20] : memref<1x32xf32, #tpu.memory_space<vmem>>, vector<1x32xf32>
    tpu.vector_store %arg7[%c0_19, %c0_20], %44 {strides = array<i32>} : memref<1x32xf32, #tpu.memory_space<vmem>>, vector<1x32xf32>,
    %c0_21 = arith.constant 0 : index
    %c0_22 = arith.constant 0 : index
    %46 = vector.load %arg5[%c0_21, %c0_22] : memref<1x1xf32, #tpu.memory_space<vmem>>, vector<1x1xf32>
    tpu.vector_store %arg5[%c0_21, %c0_22], %25 {strides = array<i32>} : memref<1x1xf32, #tpu.memory_space<vmem>>, vector<1x1xf32>,
    %c0_i32_23 = arith.constant 0 : i32
    %47 = arith.cmpi eq, %arg1, %c0_i32_23 : i32
    %48 = arith.extui %47 : i1 to i32
    %c0_i32_24 = arith.constant 0 : i32
    %49 = arith.cmpi ne, %48, %c0_i32_24 : i32
    scf.if %49 {
      %c0_25 = arith.constant 0 : index
      %c0_26 = arith.constant 0 : index
      %50 = vector.load %arg6[%c0_25, %c0_26] : memref<1x1xf32, #tpu.memory_space<vmem>>, vector<1x1xf32>
      %51 = tpu.reciprocal %50 {approx = true} : vector<1x1xf32> -> vector<1x1xf32>
      %c0_27 = arith.constant 0 : index
      %c0_28 = arith.constant 0 : index
      %52 = vector.load %arg7[%c0_27, %c0_28] : memref<1x32xf32, #tpu.memory_space<vmem>>, vector<1x32xf32>
      %53 = vector.broadcast %51 : vector<1x1xf32> to vector<1x32xf32>
      %54 = arith.mulf %52, %53 : vector<1x32xf32>
      %c0_29 = arith.constant 0 : index
      %c0_30 = arith.constant 0 : index
      %c0_31 = arith.constant 0 : index
      %55 = vector.load %arg4[%c0_29, %c0_30, %c0_31] : memref<1x1x32xf32, #tpu.memory_space<vmem>>, vector<1x1x32xf32>
      %56 = vector.shape_cast %55 : vector<1x1x32xf32> to vector<1x32xf32>
      %57 = vector.shape_cast %54 : vector<1x32xf32> to vector<1x1x32xf32>
      tpu.vector_store %arg4[%c0_29, %c0_30, %c0_31], %57 {strides = array<i32>} : memref<1x1x32xf32, #tpu.memory_space<vmem>>, vector<1x1x32xf32>,
    } else {
    }
    return
  }
  func.func @transform_0(%arg0: i32, %arg1: i32) -> (i32, i32, i32) {
    %c0_i32 = arith.constant 0 : i32
    %c0_i32_0 = arith.constant 0 : i32
    return %arg0, %arg1, %c0_i32 : i32, i32, i32
  }
  func.func @transform_1(%arg0: i32, %arg1: i32) -> (i32, i32) {
    %c0_i32 = arith.constant 0 : i32
    %c0_i32_0 = arith.constant 0 : i32
    %c0_i32_1 = arith.constant 0 : i32
    return %c0_i32, %c0_i32_0 : i32, i32
  }
  func.func @transform_2(%arg0: i32, %arg1: i32) -> (i32, i32, i32) {
    %c0_i32 = arith.constant 0 : i32
    %c0_i32_0 = arith.constant 0 : i32
    %c0_i32_1 = arith.constant 0 : i32
    return %arg0, %c0_i32, %c0_i32_0 : i32, i32, i32
  }
}

</mosaic_0001>

<llo_original>
// kernel: tpu_custom_call.1
$region0: #{tpu_custom_call.1}
  #allocation0 [shape = 'u32[]', space=smem, size = 0x4, offset = 0x4, fixed_abs, tag = 'smem constant byte address 0x4 - core index']
  #allocation1 [shape = 'u32[144,128]{1,0:T(1,128)}', space=vmem, size = 0x12000, scoped, tag = 'internal scratch']
  #allocation2 [shape = 'f32[1,1]{1,0:T(1,128)}', space=vmem, size = 0x200, scoped, tag = 'scratch operand']
  #allocation3 [shape = 'f32[1,1]{1,0:T(1,128)}', space=vmem, size = 0x200, scoped, tag = 'scratch operand']
  #allocation4 [shape = 'f32[1,32]{1,0:T(1,128)}', space=vmem, size = 0x200, scoped, tag = 'scratch operand']
  %s0 = inlined_call_operand.hbm [shape: f32[1,8,32], index: 0, kind: input, shape index: {}]
  %s1 = inlined_call_operand.vmem [shape: f32[1,32], index: 1, kind: input, shape index: {}]
  %s2 = inlined_call_operand.hbm [shape: f32[1,1,32], index: 2, kind: output, shape index: {}]
  %s3 = sld [smem:[#allocation0]]
  $region30: #{tpu_custom_call.1} parent=0
    _
  %s5 = ssub.s32 1, %s3
  %s6 = scalar_select 0, %s5, %s3
  $region1: #{tpu_custom_call.1} parent=0
    #allocation5 [shape = 'u8[4096]{0}', space=vmem, size = 0x1000, scoped, tag = 'input window, operand 0, single buffered']
    #allocation6 [shape = 's32[1]{0}', space=sflag, size = 0x4, scoped, tag = 'scoped memory for tpu_custom_call.1']
    #allocation7 [shape = 's32[1]{0}', space=sflag, size = 0x4, scoped, tag = 'scoped memory for tpu_custom_call.1']
    #allocation8 [shape = 'u8[512]{0}', space=vmem, size = 0x400, scoped, tag = 'output window, operand 0, single buffered']
    %7 = vsyncpa [#allocation6], 0
    %8 = vsyncpa [#allocation7], 0
    // Predicated region
    $region2: #{tpu_custom_call.1} parent=1 // pred_check
      _
    $region3: #{tpu_custom_call.1} parent=1 // pred_check_branch
      %10 = sbr.rel (0) target = $region5
    $region4: #{tpu_custom_call.1} parent=1 // pred_region
      %s12 = ssub.s32 128, 128
      %13 = vsyncadd [#allocation6], %s12
      %s15 = sshll.u32 [#allocation5], 4
      %s16 = int_to_ptr.vmem [resolvable:$true] %s15
      %18 = dma.hbm_to_vmem [thread:$0]  %s0, 128, %s16, [#allocation6]
    $region5: #{tpu_custom_call.1} parent=1 // pred_fallthru
      _
    // Predicated region
    $region6: #{tpu_custom_call.1} parent=1 // pred_check
      _
    $region7: #{tpu_custom_call.1} parent=1 // pred_check_branch
      %20 = sbr.rel (0) target = $region9
    $region8: #{tpu_custom_call.1} parent=1 // pred_region
      _
    $region9: #{tpu_custom_call.1} parent=1 // pred_fallthru
      _
    // Predicated region
    $region10: #{tpu_custom_call.1} parent=1 // pred_check
      _
    $region11: #{tpu_custom_call.1} parent=1 // pred_check_branch
      %22 = sbr.rel (0) target = $region13
    $region12: #{tpu_custom_call.1} parent=1 // pred_region
      %23 = dma.done [#allocation6], 128
    $region13: #{tpu_custom_call.1} parent=1 // pred_fallthru
      _
    %p24 = scmp.eq.s32.totalorder 0, 0
    // Predicated region
    $region14: #{tpu_custom_call.1} parent=1 // pred_check
      %p25 = pneg %p24
    $region15: #{tpu_custom_call.1} parent=1 // pred_check_branch
      %27 = sbr.rel (%p25) target = $region17
    $region16: #{tpu_custom_call.1} parent=1 // pred_region
      %vm28 = vcmask 0
      %29 = vst.msk [vmem:[#allocation2] sm:$0x1] %vm28, -inf
      %30 = vst.msk [vmem:[#allocation3] sm:$0x1] %vm28, 0.0
      %vm31 = vcmask 253952
      %32 = vst.msk [vmem:[#allocation4] sm:$0x1] %vm31, 0.0
    $region17: #{tpu_custom_call.1} parent=1 // pred_fallthru
      _
    %v33 = vld [vmem:[#allocation5] sm:$0xff]
    %v34 = vld [vmem:[%s1] sm:$0x1]
    %v35 = vlaneseq
    %v36 = vshrl.u32 %v35, 7
    %s37 = smul.u32 0, 8
    %v38 = vstv %s37
    %v39 = vadd.s32 %v36, %v38
    %vm40 = vcmp.lt.s32.totalorder %v39, 8
    %v41 = vsel %vm40, 1, 0
    %vm42 = vcmp.eq.s32.totalorder %v41, 1
    %v43 = vsel %vm42, %v33, 0.0
    %v45 = vlaneseq
    %v46 = vshrl.u32 %v45, 7
    %v47 = vsub.s32 0, %v46
    %v48 = vrot.slane %v34, %v47
    %v50 = vmul.f32 %v43, %v48
    %vm51 = vcmask 261120
    %v52 = vsel %vm51, %v50, 0.0
    %53 = vadd.xlane.f32.xlu0 %v52
    %v54 = vpop.xlane.xlu0 %53
    %v55 = vsel %vm40, %v54, -inf
    %v56 = vld [vmem:[#allocation2] sm:$0x1]
    %v57 = vrot.slane %v55, 4
    %v58 = vmax.f32 %v55, %v57
    %v59 = vrot.slane %v58, 2
    %v60 = vmax.f32 %v58, %v59
    %v61 = vrot.slane %v60, 1
    %v62 = vmax.f32 %v60, %v61
    %v63 = vmax.f32 %v56, %v62
    %v64 = vsub.f32 %v56, %v63
    %v65 = vmul.f32 %v64, 1.442695
    %v66 = vpow.pop %v65
    %v68 = vlaneseq
    %v69 = vshrl.u32 %v68, 7
    %v70 = vsub.s32 0, %v69
    %v71 = vrot.slane %v63, %v70
    %v73 = vsub.f32 %v55, %v71
    %v74 = vmul.f32 %v73, 1.442695
    %v75 = vpow.pop %v74
    %v76 = vld [vmem:[#allocation3] sm:$0x1]
    %v77 = vmul.f32 %v66, %v76
    %vm78 = vcmask 7168
    %v79 = vsel %vm78, %v75, 0.0
    %v80 = vrot.slane %v79, 4
    %v81 = vadd.f32 %v79, %v80
    %v82 = vrot.slane %v81, 2
    %v83 = vadd.f32 %v81, %v82
    %v84 = vrot.slane %v83, 1
    %v85 = vadd.f32 %v83, %v84
    %v86 = vadd.f32 %v77, %v85
    %vm87 = vcmask 0
    %88 = vst.msk [vmem:[#allocation3] sm:$0x1] %vm87, %v86
    %v89 = vld [vmem:[#allocation4] sm:$0x1]
    %91 = vset.pattern.permute.xlu0 0
    %92 = vperm.xlu0 %91, %v66
    %v93 = vpop.permute.xlu0 %92
    %v95 = vlaneseq
    %v96 = vshrl.u32 %v95, 7
    %v97 = vsub.s32 0, %v96
    %v98 = vrot.slane %v93, %v97
    %v99 = vmul.f32 %v98, %v89
    %101 = vset.pattern.permute.xlu0 0
    %102 = vperm.xlu0 %101, %v75
    %v103 = vpop.permute.xlu0 %102
    %v105 = vmul.f32 %v43, %v103
    %v106 = vsel %vm51, %v105, 0.0
    %v107 = vrot.slane %v106, 4
    %v108 = vadd.f32 %v106, %v107
    %v109 = vrot.slane %v108, 2
    %v110 = vadd.f32 %v108, %v109
    %v111 = vrot.slane %v110, 1
    %v112 = vadd.f32 %v110, %v111
    %v113 = vadd.f32 %v99, %v112
    %vm114 = vcmask 253952
    %115 = vst.msk [vmem:[#allocation4] sm:$0x1] %vm114, %v113
    %116 = vst.msk [vmem:[#allocation2] sm:$0x1] %vm87, %v63
    // Predicated region
    $region18: #{tpu_custom_call.1} parent=1 // pred_check
      %p117 = pneg %p24
    $region19: #{tpu_custom_call.1} parent=1 // pred_check_branch
      %119 = sbr.rel (%p117) target = $region21
    $region20: #{tpu_custom_call.1} parent=1 // pred_region
      %v120 = vld [vmem:[#allocation3] sm:$0x1]
      %v121 = vrcp.pop %v120
      %v122 = vld [vmem:[#allocation4] sm:$0x1]
      %124 = vset.pattern.permute.xlu0 0
      %125 = vperm.xlu0 %124, %v121
      %v126 = vpop.permute.xlu0 %125
      %v128 = vlaneseq
      %v129 = vshrl.u32 %v128, 7
      %v130 = vsub.s32 0, %v129
      %v131 = vrot.slane %v126, %v130
      %v132 = vmul.f32 %v122, %v131
      %133 = vst.msk [vmem:[#allocation8] sm:$0x1] %vm114, %v132
    $region21: #{tpu_custom_call.1} parent=1 // pred_fallthru
      _
    // Predicated region
    $region22: #{tpu_custom_call.1} parent=1 // pred_check
      _
    $region23: #{tpu_custom_call.1} parent=1 // pred_check_branch
      %135 = sbr.rel (0) target = $region25
    $region24: #{tpu_custom_call.1} parent=1 // pred_region
      %s137 = ssub.s32 16, 16
      %138 = vsyncadd [#allocation7], %s137
      %s140 = sshll.u32 [#allocation8], 4
      %s141 = int_to_ptr.vmem [resolvable:$true] %s140
      %143 = dma.vmem_to_hbm [thread:$0]  %s141, 16, %s2, [#allocation7]
    $region25: #{tpu_custom_call.1} parent=1 // pred_fallthru
      _
    // Predicated region
    $region26: #{tpu_custom_call.1} parent=1 // pred_check
      _
    $region27: #{tpu_custom_call.1} parent=1 // pred_check_branch
      %145 = sbr.rel (0) target = $region29
    $region28: #{tpu_custom_call.1} parent=1 // pred_region
      %146 = dma.done [#allocation7], 16
    $region29: #{tpu_custom_call.1} parent=1 // pred_fallthru
      _
    %147 = vsyncpa [#allocation6], 1
    %148 = vsyncpa [#allocation7], 1

</llo_original>
